<compile_context>
chip_gen: v6e
topology: v6e:2x2x1
jax: 0.10.0
libtpu: 0.0.40
codegen_flags: <defaults>
</compile_context>

<pallas_src>
import math
import functools

import jax
import jax.numpy as jnp
from jax import lax
from jax.experimental import pallas as pl
from jax.experimental.pallas import tpu as pltpu


_BN_EVAL_SCALE = 1.0 / math.sqrt(1.0 + 1e-5)   # eval BatchNorm, default stats
_KEY_SENTINEL = 0x7F000000                     # bits of ~1.7e38 (finite f32)


def _round_up(v, m):
    return (v + m - 1) // m * m


@functools.lru_cache(maxsize=1)
def _vmem_limit():
    """Generation-aware VMEM cap: ~3/4 of physical, 48 MiB safe fallback."""
    try:
        info = pltpu.get_tpu_info()
        for attr in ("vmem_capacity_bytes", "vmem_size_bytes", "vmem_bytes"):
            cap = getattr(info, attr, None)
            if cap:
                return int(cap) * 3 // 4
    except Exception:
        pass
    return 48 * 1024 * 1024


# ----------------------------------------------------------------------------
# Kernel 1: knn_interpolate (PyG semantics: k nearest within same batch,
# inverse-squared-distance weights clamped at 1e-16, weighted average).
# Grid: (batch, skip-row tile); candidates restricted to the per-batch slice.
# ----------------------------------------------------------------------------
def _knn_interp_kernel(ps_ref, bs_ref, pt_ref, bb_ref, x_ref, o_ref,
                       *, k, low_mask):
    ps = ps_ref[...]                      # (TM, 3) target (skip) positions
    pt = pt_ref[...]                      # (3, Nc) same-batch source positions
    tm = ps.shape[0]
    nc = pt.shape[1]

    # Squared distances via 3 VPU broadcast passes (exact, no depth-3 MXU push)
    d2 = jnp.zeros((tm, nc), jnp.float32)
    for c in range(3):
        diff = ps[:, c:c + 1] - pt[c:c + 1, :]
        d2 = d2 + diff * diff

    # Safety mask against padded skip rows / unexpected batch layout.
    d2 = jnp.where(bs_ref[...] == bb_ref[...], d2, jnp.float32(1e30))

    # Order-preserving int32 keys: column index in the low ~log2(Nc) mantissa
    # bits -> ONE jnp.min per top-k iteration gives both the min distance
    # (high bits) and a unique argmin (ties broken arbitrarily, as in PyG).
    col = lax.broadcasted_iota(jnp.int32, (tm, nc), 1)
    hi = jnp.int32(~low_mask)
    keys = jnp.bitwise_or(
        jnp.bitwise_and(pltpu.bitcast(d2, jnp.int32), hi), col)

    w = jnp.zeros((tm, nc), jnp.float32)
    for _ in range(k):
        mk = jnp.min(keys, axis=1, keepdims=True)                 # (TM, 1)
        dmin = pltpu.bitcast(jnp.bitwise_and(mk, hi), jnp.float32)
        wsel = pl.reciprocal(jnp.maximum(dmin, 1e-16), approx=True)
        sel = keys == mk                                          # one col/row
        w = w + jnp.where(sel, wsel, 0.0)
        keys = jnp.where(sel, jnp.int32(_KEY_SENTINEL), keys)

    # Unnormalised bf16 weights on the MXU, normalise after the matmul
    # (TM*F ops instead of a TM*Nc divide).
    den = jnp.sum(w, axis=1, keepdims=True)
    acc = jnp.dot(w.astype(jnp.bfloat16), x_ref[...],
                  preferred_element_type=jnp.float32)
    o_ref[...] = acc * pl.reciprocal(den, approx=True)


def knn_interpolate(x, pos, pos_skip, batch, batch_skip, *, k=3, B=1):
    ns, n, f = pos_skip.shape[0], pos.shape[0], x.shape[1]

    # Per-batch candidate slicing (contiguous uniform batching; otherwise fall
    # back to a single slice covering everything — the batch mask handles it).
    nb = B if (B > 1 and n % B == 0 and ns % B == 0) else 1
    n_per = n // nb
    ns_per = ns // nb

    # Row tile: single tile when it fits comfortably; cap the (TM, Nc) working
    # set against the generation-aware VMEM budget (smaller tiles on v7x).
    ns_per_pad = _round_up(ns_per, 8)
    tm = ns_per_pad
    budget = max(_vmem_limit() // 4, 1 << 20)
    while tm > 8 and 6 * tm * n_per * 4 > budget:
        tm = _round_up(tm // 2, 8)
    ns_per_pad = _round_up(ns_per, tm)

    ps = jnp.zeros((nb, ns_per_pad, 3), jnp.float32).at[:, :ns_per].set(
        pos_skip.astype(jnp.float32).reshape(nb, ns_per, 3))
    bs = jnp.full((nb, ns_per_pad, 1), -1, jnp.int32).at[:, :ns_per, 0].set(
        batch_skip.astype(jnp.int32).reshape(nb, ns_per))
    pt = jnp.transpose(pos.astype(jnp.float32).reshape(nb, n_per, 3), (0, 2, 1))
    bb = batch.astype(jnp.int32).reshape(nb, 1, n_per)
    xb = x.astype(jnp.bfloat16).reshape(nb, n_per, f)

    low_bits = max(1, math.ceil(math.log2(max(n_per, 2))))
    low_mask = (1 << low_bits) - 1

    steps = nb * (ns_per_pad // tm)
    flops = steps * (2 * tm * n_per * (3 + f) + 10 * k * tm * n_per)
    bytes_accessed = (4 * nb * (ns_per_pad * 4 + 4 * n_per + ns_per_pad * f)
                      + 2 * nb * n_per * f)

    out = pl.pallas_call(
        functools.partial(_knn_interp_kernel, k=k, low_mask=low_mask),
        grid=(nb, ns_per_pad // tm),
        in_specs=[
            pl.BlockSpec((None, tm, 3), lambda b, i: (b, i, 0)),
            pl.BlockSpec((None, tm, 1), lambda b, i: (b, i, 0)),
            pl.BlockSpec((None, 3, n_per), lambda b, i: (b, 0, 0)),
            pl.BlockSpec((None, 1, n_per), lambda b, i: (b, 0, 0)),
            pl.BlockSpec((None, n_per, f), lambda b, i: (b, 0, 0)),
        ],
        out_specs=pl.BlockSpec((None, tm, f), lambda b, i: (b, i, 0)),
        out_shape=jax.ShapeDtypeStruct((nb, ns_per_pad, f), jnp.float32),
        compiler_params=pltpu.CompilerParams(
            dimension_semantics=("parallel", "parallel"),
            vmem_limit_bytes=_vmem_limit()),
        cost_estimate=pl.CostEstimate(
            flops=int(flops), transcendentals=0,
            bytes_accessed=int(bytes_accessed)),
    )(ps, bs, pt, bb, xb)
    return out[:, :ns_per, :].reshape(ns, f)


# ----------------------------------------------------------------------------
# Kernel 2: cross-attention.  W_q/W_k/W_v + positional encoding + MHA in-proj
# + 1/sqrt(hd) are folded host-side into full-width combined weights; Q is one
# matmul, K/V one fused matmul.  Dropouts are eval-mode identity.
# ----------------------------------------------------------------------------
def _attn_kernel(ep_ref, gt_ref, wq_ref, qb_ref, wkv_ref, kvb_ref,
                 wo_ref, bo_ref, o_ref, *, num_heads):
    h = num_heads
    d = wq_ref.shape[1]
    hd = d // h
    bt = ep_ref.shape[0]

    for j in range(bt):
        ep = ep_ref[j].astype(jnp.bfloat16)              # (Eb, 3)
        gt = gt_ref[j].astype(jnp.bfloat16)              # (T, gd)
        eb = ep.shape[0]

        q = jnp.dot(ep, wq_ref[...],
                    preferred_element_type=jnp.float32) + qb_ref[...]   # (Eb, D), scale folded
        kv = jnp.dot(gt, wkv_ref[...],
                     preferred_element_type=jnp.float32) + kvb_ref[...]  # (T, 2D), PE folded
        k = kv[:, :d]
        v = kv[:, d:]

        acc = jnp.zeros((eb, d), jnp.float32)
        for i in range(h):
            sl = slice(i * hd, (i + 1) * hd)
            q_i = q[:, sl].astype(jnp.bfloat16)
            k_i = k[:, sl].astype(jnp.bfloat16)
            v_i = v[:, sl].astype(jnp.bfloat16)
            s = jnp.einsum('ef,tf->et', q_i, k_i,
                           preferred_element_type=jnp.float32)
            m = jnp.max(s, axis=-1, keepdims=True)
            p = jnp.exp(s - m)
            p = p * pl.reciprocal(jnp.sum(p, axis=-1, keepdims=True),
                                  approx=True)
            o_i = jnp.dot(p.astype(jnp.bfloat16), v_i,
                          preferred_element_type=jnp.float32)           # (Eb, hd)
            acc = acc + jnp.dot(o_i.astype(jnp.bfloat16), wo_ref[i],
                                preferred_element_type=jnp.float32)
        o_ref[j] = acc + bo_ref[...]


def _prep_attn_params(ap, pe, num_heads):
    """Fold W_q/W_k/W_v + positional encoding + MHA in-projection + softmax
    scale into combined full-width weights (exact linear algebra, host-side)."""
    d = ap["w_q"][0].shape[1]
    h = num_heads
    hd = d // h
    scale = 1.0 / math.sqrt(hd)

    wq, bq = ap["w_q"]; wk, bk = ap["w_k"]; wv, bv = ap["w_v"]
    wiq, biq = ap["in_q"]; wik, bik = ap["in_k"]; wiv, biv = ap["in_v"]
    wo, bo = ap["out"]

    wq_c = (wq @ wiq) * scale                      # (3, D)
    qb_c = (bq @ wiq + biq) * scale                # (1, D)
    wk_c = wk @ wik                                # (gd, D)
    kb_c = bk @ wik + bik + pe @ wik               # (T, D), PE folded
    wv_c = wv @ wiv
    vb_c = bv @ wiv + biv + pe @ wiv

    return dict(
        wq=wq_c.astype(jnp.bfloat16), qb=qb_c,
        wkv=jnp.concatenate([wk_c, wv_c], axis=1).astype(jnp.bfloat16),
        kvb=jnp.concatenate([kb_c, vb_c], axis=1),
        wo=wo.reshape(h, hd, d).astype(jnp.bfloat16), bo=bo)


def attention_pallas(edge_pos_b, gtok_b, pe, ap, *, num_heads):
    b, eb, _ = edge_pos_b.shape
    _, t, gd = gtok_b.shape
    d = ap["w_q"][0].shape[1]
    hd = d // num_heads
    pp = _prep_attn_params(ap, pe, num_heads)

    # Block a few batch elements per grid step (amortise per-step overhead)
    # while keeping >=2 grid blocks for v7x megacore sharding.
    bt = 2 if (b >= 4 and b % 2 == 0) else 1
    nblk = b // bt

    def rep(shape):
        nd = len(shape)
        return pl.BlockSpec(shape, lambda i, _nd=nd: (0,) * _nd)

    in_specs = [
        pl.BlockSpec((bt, eb, 3), lambda i: (i, 0, 0)),
        pl.BlockSpec((bt, t, gd), lambda i: (i, 0, 0)),
        rep((3, d)), rep((1, d)),
        rep((gd, 2 * d)), rep((t, 2 * d)),
        rep((num_heads, hd, d)), rep((1, d)),
    ]
    flops = b * (2 * eb * 3 * d + 4 * t * gd * d + 4 * eb * t * d
                 + 2 * eb * d * d)
    bytes_accessed = (4 * b * (eb * 3 + t * gd + eb * d)
                      + 2 * (3 * d + gd * 2 * d + t * 2 * d + d * d))

    return pl.pallas_call(
        functools.partial(_attn_kernel, num_heads=num_heads),
        grid=(nblk,),
        in_specs=in_specs,
        out_specs=pl.BlockSpec((bt, eb, d), lambda i: (i, 0, 0)),
        out_shape=jax.ShapeDtypeStruct((b, eb, d), jnp.float32),
        compiler_params=pltpu.CompilerParams(
            dimension_semantics=("parallel",),
            vmem_limit_bytes=_vmem_limit()),
        cost_estimate=pl.CostEstimate(
            flops=int(flops), transcendentals=int(b * num_heads * eb * t),
            bytes_accessed=int(bytes_accessed)),
    )(edge_pos_b.astype(jnp.float32), gtok_b.astype(jnp.float32),
      pp["wq"], pp["qb"], pp["wkv"], pp["kvb"], pp["wo"], pp["bo"])


# ----------------------------------------------------------------------------
# Kernel 3: fused stack of NNConv(aggr='mean') layers, gridded per batch.
# nn = MLP([P, Cin*Cout], plain_last=False) == Linear -> BN(eval) -> ReLU,
# with the BN scale folded host-side into one full-width matmul per layer.
# ----------------------------------------------------------------------------
def _nnconv_stack_kernel(x_ref, src_ref, tgt_ref, pseudo_ref, *refs,
                         layer_dims, relu_flags):
    o_ref = refs[-1]
    wrefs = refs[:-1]

    nn_nodes = x_ref.shape[0]                    # nodes in this batch
    e = pseudo_ref.shape[0]                      # edges in this batch

    pseudo = pseudo_ref[...]                     # (E, P) bf16
    src = src_ref[...]                           # (E, 1) int32, local indices
    tgt = tgt_ref[...]                           # (1, E) int32, local indices

    # One-hot gather/scatter from broadcasted compares (no (E,Nn) i32 iotas),
    # exact in bf16, built once and reused by every layer.
    col = lax.broadcasted_iota(jnp.int32, (1, nn_nodes), 1)
    gather = (src == col).astype(jnp.bfloat16)               # (E, Nn)
    row = lax.broadcasted_iota(jnp.int32, (nn_nodes, 1), 0)
    scatter = (row == tgt).astype(jnp.bfloat16)              # (Nn, E)

    # In-degree for 'mean' aggregation on the MXU (computed once, reused).
    deg = jnp.dot(scatter, jnp.ones((e, 8), jnp.bfloat16),
                  preferred_element_type=jnp.float32)[:, 0:1]
    inv_deg = 1.0 / jnp.maximum(deg, 1.0)                    # (Nn, 1)

    x = x_ref[...]                                           # (Nn, C0) f32
    for l, (c_in, c_out) in enumerate(layer_dims):
        w_mlp = wrefs[4 * l + 0][...]        # (P, c_in*c_out) bf16, BN folded
        b_mlp = wrefs[4 * l + 1][...]        # (1, c_in*c_out) f32,  BN folded
        w_root = wrefs[4 * l + 2][...]       # (c_in, c_out)   bf16
        b_root = wrefs[4 * l + 3][...]       # (1, c_out)      f32

        x_bf = x.astype(jnp.bfloat16)
        x_src = jnp.dot(gather, x_bf, preferred_element_type=jnp.float32)  # (E, c_in)

        # Single full-width edge-MLP matmul (Linear + eval-BN + ReLU).
        h = jnp.dot(pseudo, w_mlp, preferred_element_type=jnp.float32) + b_mlp
        h = jnp.maximum(h, 0.0)                                            # (E, c_in*c_out)

        # msg[e] = x_src[e] @ h[e].reshape(c_in, c_out) via static lane slices
        msg = jnp.zeros((e, c_out), jnp.float32)
        for c in range(c_in):
            msg = msg + x_src[:, c:c + 1] * h[:, c * c_out:(c + 1) * c_out]

        agg = jnp.dot(scatter, msg.astype(jnp.bfloat16),
                      preferred_element_type=jnp.float32) * inv_deg        # (Nn, c_out)
        out = agg + jnp.dot(x_bf, w_root,
                            preferred_element_type=jnp.float32) + b_root
        if relu_flags[l]:
            out = jnp.maximum(out, 0.0)
        x = out

    o_ref[...] = x


def _prep_conv_params(conv_params):
    prepped = []
    for lp in conv_params:
        c_in, c_out = lp["w_root"].shape
        prepped.append(dict(
            w_mlp=(lp["w_mlp"] * _BN_EVAL_SCALE).astype(jnp.bfloat16),
            b_mlp=lp["b_mlp"] * _BN_EVAL_SCALE,
            w_root=lp["w_root"].astype(jnp.bfloat16),
            b_root=lp["b_root"],
            dims=(c_in, c_out)))
    return prepped


def nnconv_stack(x, src, tgt, pseudo, conv_params, *, drop_act, B=1):
    n_nodes, c0 = x.shape
    e, p = pseudo.shape
    prepped = _prep_conv_params(conv_params)
    n_layers = len(prepped)
    layer_dims = tuple(lp["dims"] for lp in prepped)
    relu_flags = tuple(not (i == n_layers - 1 and drop_act)
                       for i in range(n_layers))
    c_last = layer_dims[-1][1]

    # The batched graph is block-diagonal (edges never cross graphs), so each
    # batch is an independent grid step; rebase indices to local node ids.
    nb = B if (B > 1 and n_nodes % B == 0 and e % B == 0) else 1
    ns_per = n_nodes // nb
    e_per = e // nb
    base = (jnp.arange(nb, dtype=jnp.int32) * ns_per)

    x_b = x.astype(jnp.float32).reshape(nb, ns_per, c0)
    src_b = src.astype(jnp.int32).reshape(nb, e_per, 1) - base[:, None, None]
    tgt_b = tgt.astype(jnp.int32).reshape(nb, 1, e_per) - base[:, None, None]
    pseudo_b = pseudo.astype(jnp.bfloat16).reshape(nb, e_per, p)

    def per_batch(shape):
        nd = len(shape)
        return pl.BlockSpec((None,) + shape,
                            lambda b, _nd=nd: (b,) + (0,) * _nd)

    def rep(shape):
        nd = len(shape)
        return pl.BlockSpec(shape, lambda b, _nd=nd: (0,) * _nd)

    in_specs = [per_batch((ns_per, c0)), per_batch((e_per, 1)),
                per_batch((1, e_per)), per_batch((e_per, p))]
    args = [x_b, src_b, tgt_b, pseudo_b]
    flops = nb * 2 * ns_per * e_per * 8
    for lp in prepped:
        c_in, c_out = lp["dims"]
        in_specs += [rep((p, c_in * c_out)), rep((1, c_in * c_out)),
                     rep((c_in, c_out)), rep((1, c_out))]
        args += [lp["w_mlp"], lp["b_mlp"], lp["w_root"], lp["b_root"]]
        flops += nb * (2 * e_per * ns_per * c_in          # gather
                       + 2 * e_per * p * c_in * c_out     # edge MLP
                       + 2 * e_per * c_in * c_out         # messages
                       + 2 * ns_per * e_per * c_out       # scatter / mean
                       + 2 * ns_per * c_in * c_out)       # root
    bytes_accessed = (4 * n_nodes * (c0 + c_last) + 8 * e + 2 * e * p
                      + sum(2 * p * ci * co + 2 * ci * co
                            for ci, co in layer_dims))

    out = pl.pallas_call(
        functools.partial(_nnconv_stack_kernel,
                          layer_dims=layer_dims, relu_flags=relu_flags),
        grid=(nb,),
        in_specs=in_specs,
        out_specs=per_batch((ns_per, c_last)),
        out_shape=jax.ShapeDtypeStruct((nb, ns_per, c_last), jnp.float32),
        compiler_params=pltpu.CompilerParams(
            dimension_semantics=("parallel",),
            vmem_limit_bytes=_vmem_limit()),
        cost_estimate=pl.CostEstimate(
            flops=int(flops), transcendentals=0,
            bytes_accessed=int(bytes_accessed)),
    )(*args)
    return out.reshape(n_nodes, c_last)


# ----------------------------------------------------------------------------
# Parameter setup + forward wrapper (plain JAX glue)
# ----------------------------------------------------------------------------
def _linear_init(key, din, dout):
    k1, k2 = jax.random.split(key)
    s = 1.0 / math.sqrt(din)
    w = jax.random.uniform(k1, (din, dout), jnp.float32, -s, s)
    b = jax.random.uniform(k2, (1, dout), jnp.float32, -s, s)
    return w, b


def init_params(key, *, in_channels, hidden_channels, out_channels, n_layers,
                edge_dim, global_token_dim, embed_dim, num_heads):
    keys = jax.random.split(key, 7 + 2 * n_layers)
    attn = {
        "w_q": _linear_init(keys[0], edge_dim, embed_dim),
        "w_k": _linear_init(keys[1], global_token_dim, embed_dim),
        "w_v": _linear_init(keys[2], global_token_dim, embed_dim),
        "in_q": _linear_init(keys[3], embed_dim, embed_dim),
        "in_k": _linear_init(keys[4], embed_dim, embed_dim),
        "in_v": _linear_init(keys[5], embed_dim, embed_dim),
        "out": _linear_init(keys[6], embed_dim, embed_dim),
    }
    dims = [in_channels] + [hidden_channels] * (n_layers - 1) + [out_channels]
    conv = []
    for i in range(n_layers):
        c_in, c_out = dims[i], dims[i + 1]
        w_mlp, b_mlp = _linear_init(keys[7 + 2 * i], edge_dim + embed_dim,
                                    c_in * c_out)
        w_root, _ = _linear_init(keys[8 + 2 * i], c_in, c_out)
        b_root = jnp.zeros((1, c_out), jnp.float32)   # NNConv bias init = zeros
        conv.append({"w_mlp": w_mlp, "b_mlp": b_mlp,
                     "w_root": w_root, "b_root": b_root})
    return {"attn": attn, "conv": conv, "num_heads": num_heads,
            "embed_dim": embed_dim}


def positional_encoding(t, d):
    position = jnp.arange(t, dtype=jnp.float32)[:, None]
    div_term = jnp.exp(jnp.arange(0, d, 2, dtype=jnp.float32)
                       * (-math.log(10000.0) / d))
    pe = jnp.zeros((t, d), jnp.float32)
    pe = pe.at[:, 0::2].set(jnp.sin(position * div_term))
    pe = pe.at[:, 1::2].set(jnp.cos(position * div_term))
    return pe


def ecgn_fp_forward(x, pos, batch, x_skip, pos_skip, batch_skip, edge_index,
                    global_token, params, *, B, n_layers=3, k=3,
                    patch_size=None, drop_act=False):
    assert n_layers == len(params["conv"])
    embed_dim = params["embed_dim"]

    # 1. knn interpolation of coarse features onto skip nodes
    x = knn_interpolate(x, pos, pos_skip, batch, batch_skip, k=k, B=B)

    # 2. pseudo edge attributes + edge midpoints (glue)
    src, dst = edge_index[0], edge_index[1]
    ps_src = pos_skip[src]
    ps_dst = pos_skip[dst]
    if patch_size is not None:
        pseudo_geo = jnp.clip((ps_dst - ps_src) / patch_size + 0.5, 0.0, 1.0)
    else:
        pseudo_geo = ps_dst - ps_src
    edge_pos = 0.5 * (ps_dst + ps_src)

    # 3. cross-attention of edge midpoints against global tokens
    edge_pos_b = edge_pos.reshape(B, -1, 3)
    gtok_b = global_token.reshape(B, -1, global_token.shape[-1])
    pe = positional_encoding(gtok_b.shape[1], embed_dim)
    gt = attention_pallas(edge_pos_b, gtok_b, pe, params["attn"],
                          num_heads=params["num_heads"])
    gt = gt.reshape(-1, embed_dim)
    pseudo = jnp.concatenate([pseudo_geo, gt], axis=-1)        # (E, 3+embed)

    # 4. skip concat + fused NNConv stack (per-batch grid, x stays on-chip)
    if x_skip is not None:
        x = jnp.concatenate([x, x_skip], axis=1)
    x = nnconv_stack(x, src, dst, pseudo, params["conv"],
                     drop_act=drop_act, B=B)
    return x, pos_skip, batch_skip


# ----------------------------------------------------------------------------
if __name__ == "__main__":
    B = 2
    n_per, ns_per, t_per, e_per = 16, 32, 8, 64
    feat_coarse, feat_skip = 4, 4
    in_channels = feat_coarse + feat_skip          # after concat with x_skip
    hidden_channels, out_channels = 16, 8
    edge_dim, global_token_dim, embed_dim, num_heads = 3, 128, 64, 4
    n_layers, k = 3, 3

    key = jax.random.PRNGKey(0)
    keys = jax.random.split(key, 10)
    x = jax.random.normal(keys[0], (B * n_per, feat_coarse), jnp.float32)
    pos = jax.random.normal(keys[1], (B * n_per, 3), jnp.float32)
    batch = jnp.repeat(jnp.arange(B, dtype=jnp.int32), n_per)
    x_skip = jax.random.normal(keys[2], (B * ns_per, feat_skip), jnp.float32)
    pos_skip = jax.random.normal(keys[3], (B * ns_per, 3), jnp.float32)
    batch_skip = jnp.repeat(jnp.arange(B, dtype=jnp.int32), ns_per)
    # edges grouped contiguously per batch (required by edge_pos.view(B, -1, 3))
    src = jnp.concatenate([
        b * ns_per + jax.random.randint(keys[4 + b], (e_per,), 0, ns_per)
        for b in range(B)])
    dst = jnp.concatenate([
        b * ns_per + jax.random.randint(keys[6 + b], (e_per,), 0, ns_per)
        for b in range(B)])
    edge_index = jnp.stack([src, dst]).astype(jnp.int32)
    global_token = jax.random.normal(keys[8], (B * t_per, global_token_dim),
                                     jnp.float32)

    params = init_params(
        keys[9], in_channels=in_channels, hidden_channels=hidden_channels,
        out_channels=out_channels, n_layers=n_layers, edge_dim=edge_dim,
        global_token_dim=global_token_dim, embed_dim=embed_dim,
        num_heads=num_heads)

    out_x, out_pos, out_batch = ecgn_fp_forward(
        x, pos, batch, x_skip, pos_skip, batch_skip, edge_index, global_token,
        params, B=B, n_layers=n_layers, k=k, patch_size=None, drop_act=False)
    jax.block_until_ready(out_x)
    assert out_x.shape == (B * ns_per, out_channels)
    assert bool(jnp.all(jnp.isfinite(out_x)))
    print("KERNEL_OK")
</pallas_src>

<mosaic_0001>
module attributes {stable_mosaic.version = 11 : i64} {
  func.func @_knn_interp_kernel(%arg0: i32, %arg1: i32, %arg2: memref<1x32x3xf32, #tpu.memory_space<vmem>>, %arg3: memref<1x32x1xi32, #tpu.memory_space<vmem>>, %arg4: memref<1x3x16xf32, #tpu.memory_space<vmem>>, %arg5: memref<1x1x16xi32, #tpu.memory_space<vmem>>, %arg6: memref<1x16x4xbf16, #tpu.memory_space<vmem>>, %arg7: memref<1x32x4xf32, #tpu.memory_space<vmem>>) attributes {dimension_semantics = [#tpu.dimension_semantics<parallel>, #tpu.dimension_semantics<parallel>], iteration_bounds = array<i64: 2, 1>, scalar_prefetch = 0 : i64, scratch_operands = 0 : i64, tpu.core_type = #tpu.core_type<tc>, window_params = [{transform_indices = @transform_0, window_bounds = array<i64: 1, 32, 3>}, {transform_indices = @transform_1, window_bounds = array<i64: 1, 32, 1>}, {transform_indices = @transform_2, window_bounds = array<i64: 1, 3, 16>}, {transform_indices = @transform_3, window_bounds = array<i64: 1, 1, 16>}, {transform_indices = @transform_4, window_bounds = array<i64: 1, 16, 4>}, {transform_indices = @transform_5, window_bounds = array<i64: 1, 32, 4>}]} {
    %c0 = arith.constant 0 : index
    %c0_0 = arith.constant 0 : index
    %c0_1 = arith.constant 0 : index
    %0 = vector.load %arg2[%c0, %c0_0, %c0_1] : memref<1x32x3xf32, #tpu.memory_space<vmem>>, vector<1x32x3xf32>
    %1 = vector.shape_cast %0 : vector<1x32x3xf32> to vector<32x3xf32>
    %c0_2 = arith.constant 0 : index
    %c0_3 = arith.constant 0 : index
    %c0_4 = arith.constant 0 : index
    %2 = vector.load %arg4[%c0_2, %c0_3, %c0_4] : memref<1x3x16xf32, #tpu.memory_space<vmem>>, vector<1x3x16xf32>
    %3 = vector.shape_cast %2 : vector<1x3x16xf32> to vector<3x16xf32>
    %cst = arith.constant 0.000000e+00 : f32
    %4 = vector.broadcast %cst : f32 to vector<32x16xf32>
    %5 = vector.extract_strided_slice %1 {offsets = [0, 0], sizes = [32, 1], strides = [1, 1]} : vector<32x3xf32> to vector<32x1xf32>
    %6 = vector.extract_strided_slice %3 {offsets = [0, 0], sizes = [1, 16], strides = [1, 1]} : vector<3x16xf32> to vector<1x16xf32>
    %7 = vector.broadcast %5 : vector<32x1xf32> to vector<32x16xf32>
    %8 = vector.broadcast %6 : vector<1x16xf32> to vector<32x16xf32>
    %9 = arith.subf %7, %8 : vector<32x16xf32>
    %10 = arith.mulf %9, %9 : vector<32x16xf32>
    %11 = arith.addf %4, %10 : vector<32x16xf32>
    %12 = vector.extract_strided_slice %1 {offsets = [0, 1], sizes = [32, 1], strides = [1, 1]} : vector<32x3xf32> to vector<32x1xf32>
    %13 = vector.extract_strided_slice %3 {offsets = [1, 0], sizes = [1, 16], strides = [1, 1]} : vector<3x16xf32> to vector<1x16xf32>
    %14 = vector.broadcast %12 : vector<32x1xf32> to vector<32x16xf32>
    %15 = vector.broadcast %13 : vector<1x16xf32> to vector<32x16xf32>
    %16 = arith.subf %14, %15 : vector<32x16xf32>
    %17 = arith.mulf %16, %16 : vector<32x16xf32>
    %18 = arith.addf %11, %17 : vector<32x16xf32>
    %19 = vector.extract_strided_slice %1 {offsets = [0, 2], sizes = [32, 1], strides = [1, 1]} : vector<32x3xf32> to vector<32x1xf32>
    %20 = vector.extract_strided_slice %3 {offsets = [2, 0], sizes = [1, 16], strides = [1, 1]} : vector<3x16xf32> to vector<1x16xf32>
    %21 = vector.broadcast %19 : vector<32x1xf32> to vector<32x16xf32>
    %22 = vector.broadcast %20 : vector<1x16xf32> to vector<32x16xf32>
    %23 = arith.subf %21, %22 : vector<32x16xf32>
    %24 = arith.mulf %23, %23 : vector<32x16xf32>
    %25 = arith.addf %18, %24 : vector<32x16xf32>
    %c0_5 = arith.constant 0 : index
    %c0_6 = arith.constant 0 : index
    %c0_7 = arith.constant 0 : index
    %26 = vector.load %arg3[%c0_5, %c0_6, %c0_7] : memref<1x32x1xi32, #tpu.memory_space<vmem>>, vector<1x32x1xi32>
    %27 = vector.shape_cast %26 : vector<1x32x1xi32> to vector<32x1xi32>
    %c0_8 = arith.constant 0 : index
    %c0_9 = arith.constant 0 : index
    %c0_10 = arith.constant 0 : index
    %28 = vector.load %arg5[%c0_8, %c0_9, %c0_10] : memref<1x1x16xi32, #tpu.memory_space<vmem>>, vector<1x1x16xi32>
    %29 = vector.shape_cast %28 : vector<1x1x16xi32> to vector<1x16xi32>
    %30 = vector.broadcast %27 : vector<32x1xi32> to vector<32x16xi32>
    %31 = vector.broadcast %29 : vector<1x16xi32> to vector<32x16xi32>
    %32 = arith.cmpi eq, %30, %31 : vector<32x16xi32>
    %cst_11 = arith.constant 1.000000e+30 : f32
    %33 = vector.broadcast %cst_11 : f32 to vector<32x16xf32>
    %34 = arith.select %32, %25, %33 : vector<32x16xi1>, vector<32x16xf32>
    %35 = tpu.iota {dimensions = array<i32: 1>} : vector<32x16xi32>
    %36 = tpu.bitcast %34 : vector<32x16xf32> -> vector<32x16xi32>
    %c-16_i32 = arith.constant -16 : i32
    %37 = vector.broadcast %c-16_i32 : i32 to vector<32x16xi32>
    %38 = arith.andi %36, %37 : vector<32x16xi32>
    %39 = arith.ori %38, %35 : vector<32x16xi32>
    %cst_12 = arith.constant 0.000000e+00 : f32
    %40 = vector.broadcast %cst_12 : f32 to vector<32x16xf32>
    %cst_13 = arith.constant dense<2147483647> : vector<32xi32>
    %41 = vector.multi_reduction <minsi>, %39, %cst_13 [1] : vector<32x16xi32> to vector<32xi32>
    %42 = vector.shape_cast %41 : vector<32xi32> to vector<32x1xi32>
    %c-16_i32_14 = arith.constant -16 : i32
    %43 = vector.broadcast %c-16_i32_14 : i32 to vector<32x1xi32>
    %44 = arith.andi %42, %43 : vector<32x1xi32>
    %45 = tpu.bitcast %44 : vector<32x1xi32> -> vector<32x1xf32>
    %cst_15 = arith.constant 1.000000e-16 : f32
    %46 = vector.broadcast %cst_15 : f32 to vector<32x1xf32>
    %47 = arith.maximumf %45, %46 : vector<32x1xf32>
    %48 = tpu.reciprocal %47 {approx = true} : vector<32x1xf32> -> vector<32x1xf32>
    %49 = vector.broadcast %42 : vector<32x1xi32> to vector<32x16xi32>
    %50 = arith.cmpi eq, %39, %49 : vector<32x16xi32>
    %cst_16 = arith.constant 0.000000e+00 : f32
    %51 = vector.shape_cast %48 : vector<32x1xf32> to vector<32x1xf32>
    %52 = vector.broadcast %51 : vector<32x1xf32> to vector<32x16xf32>
    %53 = vector.broadcast %cst_16 : f32 to vector<32x16xf32>
    %54 = arith.select %50, %52, %53 : vector<32x16xi1>, vector<32x16xf32>
    %55 = arith.addf %40, %54 : vector<32x16xf32>
    %c2130706432_i32 = arith.constant 2130706432 : i32
    %56 = vector.broadcast %c2130706432_i32 : i32 to vector<32x16xi32>
    %57 = arith.select %50, %56, %39 : vector<32x16xi1>, vector<32x16xi32>
    %cst_17 = arith.constant dense<2147483647> : vector<32xi32>
    %58 = vector.multi_reduction <minsi>, %57, %cst_17 [1] : vector<32x16xi32> to vector<32xi32>
    %59 = vector.shape_cast %58 : vector<32xi32> to vector<32x1xi32>
    %c-16_i32_18 = arith.constant -16 : i32
    %60 = vector.broadcast %c-16_i32_18 : i32 to vector<32x1xi32>
    %61 = arith.andi %59, %60 : vector<32x1xi32>
    %62 = tpu.bitcast %61 : vector<32x1xi32> -> vector<32x1xf32>
    %cst_19 = arith.constant 1.000000e-16 : f32
    %63 = vector.broadcast %cst_19 : f32 to vector<32x1xf32>
    %64 = arith.maximumf %62, %63 : vector<32x1xf32>
    %65 = tpu.reciprocal %64 {approx = true} : vector<32x1xf32> -> vector<32x1xf32>
    %66 = vector.broadcast %59 : vector<32x1xi32> to vector<32x16xi32>
    %67 = arith.cmpi eq, %57, %66 : vector<32x16xi32>
    %cst_20 = arith.constant 0.000000e+00 : f32
    %68 = vector.shape_cast %65 : vector<32x1xf32> to vector<32x1xf32>
    %69 = vector.broadcast %68 : vector<32x1xf32> to vector<32x16xf32>
    %70 = vector.broadcast %cst_20 : f32 to vector<32x16xf32>
    %71 = arith.select %67, %69, %70 : vector<32x16xi1>, vector<32x16xf32>
    %72 = arith.addf %55, %71 : vector<32x16xf32>
    %c2130706432_i32_21 = arith.constant 2130706432 : i32
    %73 = vector.broadcast %c2130706432_i32_21 : i32 to vector<32x16xi32>
    %74 = arith.select %67, %73, %57 : vector<32x16xi1>, vector<32x16xi32>
    %cst_22 = arith.constant dense<2147483647> : vector<32xi32>
    %75 = vector.multi_reduction <minsi>, %74, %cst_22 [1] : vector<32x16xi32> to vector<32xi32>
    %76 = vector.shape_cast %75 : vector<32xi32> to vector<32x1xi32>
    %c-16_i32_23 = arith.constant -16 : i32
    %77 = vector.broadcast %c-16_i32_23 : i32 to vector<32x1xi32>
    %78 = arith.andi %76, %77 : vector<32x1xi32>
    %79 = tpu.bitcast %78 : vector<32x1xi32> -> vector<32x1xf32>
    %cst_24 = arith.constant 1.000000e-16 : f32
    %80 = vector.broadcast %cst_24 : f32 to vector<32x1xf32>
    %81 = arith.maximumf %79, %80 : vector<32x1xf32>
    %82 = tpu.reciprocal %81 {approx = true} : vector<32x1xf32> -> vector<32x1xf32>
    %83 = vector.broadcast %76 : vector<32x1xi32> to vector<32x16xi32>
    %84 = arith.cmpi eq, %74, %83 : vector<32x16xi32>
    %cst_25 = arith.constant 0.000000e+00 : f32
    %85 = vector.shape_cast %82 : vector<32x1xf32> to vector<32x1xf32>
    %86 = vector.broadcast %85 : vector<32x1xf32> to vector<32x16xf32>
    %87 = vector.broadcast %cst_25 : f32 to vector<32x16xf32>
    %88 = arith.select %84, %86, %87 : vector<32x16xi1>, vector<32x16xf32>
    %89 = arith.addf %72, %88 : vector<32x16xf32>
    %cst_26 = arith.constant dense<0.000000e+00> : vector<32xf32>
    %90 = vector.multi_reduction <add>, %89, %cst_26 [1] : vector<32x16xf32> to vector<32xf32>
    %91 = vector.shape_cast %90 : vector<32xf32> to vector<32x1xf32>
    %92 = arith.truncf %89 : vector<32x16xf32> to vector<32x16xbf16>
    %c0_27 = arith.constant 0 : index
    %c0_28 = arith.constant 0 : index
    %c0_29 = arith.constant 0 : index
    %93 = vector.load %arg6[%c0_27, %c0_28, %c0_29] : memref<1x16x4xbf16, #tpu.memory_space<vmem>>, vector<1x16x4xbf16>
    %94 = vector.shape_cast %93 : vector<1x16x4xbf16> to vector<16x4xbf16>
    %cst_30 = arith.constant dense<0.000000e+00> : vector<32x4xf32>
    %95 = tpu.matmul %92, %94, %cst_30 {dimension_numbers = #tpu.dot_dimension_numbers<[1], [0], [0], [1], [0, 0, 1, 1], [], []>} : vector<32x16xbf16>, vector<16x4xbf16>, vector<32x4xf32> -> vector<32x4xf32>
    %96 = tpu.reciprocal %91 {approx = true} : vector<32x1xf32> -> vector<32x1xf32>
    %97 = vector.broadcast %96 : vector<32x1xf32> to vector<32x4xf32>
    %98 = arith.mulf %95, %97 : vector<32x4xf32>
    %c0_31 = arith.constant 0 : index
    %c0_32 = arith.constant 0 : index
    %c0_33 = arith.constant 0 : index
    %99 = vector.load %arg7[%c0_31, %c0_32, %c0_33] : memref<1x32x4xf32, #tpu.memory_space<vmem>>, vector<1x32x4xf32>
    %100 = vector.shape_cast %99 : vector<1x32x4xf32> to vector<32x4xf32>
    %101 = vector.shape_cast %98 : vector<32x4xf32> to vector<1x32x4xf32>
    tpu.vector_store %arg7[%c0_31, %c0_32, %c0_33], %101 {strides = array<i32>} : memref<1x32x4xf32, #tpu.memory_space<vmem>>, vector<1x32x4xf32>,
    return
  }
  func.func @transform_0(%arg0: i32, %arg1: i32) -> (i32, i32, i32) {
    %c0_i32 = arith.constant 0 : i32
    %c0_i32_0 = arith.constant 0 : i32
    return %arg0, %arg1, %c0_i32 : i32, i32, i32
  }
  func.func @transform_1(%arg0: i32, %arg1: i32) -> (i32, i32, i32) {
    %c0_i32 = arith.constant 0 : i32
    %c0_i32_0 = arith.constant 0 : i32
    return %arg0, %arg1, %c0_i32 : i32, i32, i32
  }
  func.func @transform_2(%arg0: i32, %arg1: i32) -> (i32, i32, i32) {
    %c0_i32 = arith.constant 0 : i32
    %c0_i32_0 = arith.constant 0 : i32
    %c0_i32_1 = arith.constant 0 : i32
    return %arg0, %c0_i32, %c0_i32_0 : i32, i32, i32
  }
  func.func @transform_3(%arg0: i32, %arg1: i32) -> (i32, i32, i32) {
    %c0_i32 = arith.constant 0 : i32
    %c0_i32_0 = arith.constant 0 : i32
    %c0_i32_1 = arith.constant 0 : i32
    return %arg0, %c0_i32, %c0_i32_0 : i32, i32, i32
  }
  func.func @transform_4(%arg0: i32, %arg1: i32) -> (i32, i32, i32) {
    %c0_i32 = arith.constant 0 : i32
    %c0_i32_0 = arith.constant 0 : i32
    %c0_i32_1 = arith.constant 0 : i32
    return %arg0, %c0_i32, %c0_i32_0 : i32, i32, i32
  }
  func.func @transform_5(%arg0: i32, %arg1: i32) -> (i32, i32, i32) {
    %c0_i32 = arith.constant 0 : i32
    %c0_i32_0 = arith.constant 0 : i32
    return %arg0, %arg1, %c0_i32 : i32, i32, i32
  }
}

</mosaic_0001>

<llo_original>
// kernel: tpu_custom_call.1
$region0: #{tpu_custom_call.1}
  #allocation0 [shape = 'u32[]', space=smem, size = 0x4, offset = 0x4, fixed_abs, tag = 'smem constant byte address 0x4 - core index']
  #allocation1 [shape = 'u32[144,128]{1,0:T(1,128)}', space=vmem, size = 0x12000, scoped, tag = 'internal scratch']
  %s0 = inlined_call_operand.vmem [shape: f32[2,32,3], index: 0, kind: input, shape index: {}]
  %s1 = inlined_call_operand.vmem [shape: s32[2,32,1], index: 1, kind: input, shape index: {}]
  %s2 = inlined_call_operand.vmem [shape: f32[2,3,16], index: 2, kind: input, shape index: {}]
  %s3 = inlined_call_operand.vmem [shape: s32[2,1,16], index: 3, kind: input, shape index: {}]
  %s4 = inlined_call_operand.vmem [shape: bf16[2,16,4], index: 4, kind: input, shape index: {}]
  %s5 = inlined_call_operand.vmem [shape: f32[2,32,4], index: 5, kind: output, shape index: {}]
  %s6 = sld [smem:[#allocation0]]
  $region53: #{tpu_custom_call.1} parent=0
    _
  %s8 = ssub.s32 1, %s6
  %s9 = scalar_select 0, %s8, %s6
  loop: start=0, step=1, limit=4
  $region2: #{tpu_custom_call.1} parent=0 // loop_pre_header
    _
  $region3: #{tpu_custom_call.1} parent=0 // loop_header
    %s11 = sphi 0, %s15
    %p12 = scmp.ge.s32.totalorder %s11, 4
    %s18 = sphi 0, %s30
    %s19 = sphi 0, %s26
    %s20 = sphi 0, %s18
    %s21 = sphi 0, %s19
    %s22 = sphi 0, %s20
    %s23 = sphi 0, %s21
    %s35 = sphi 0, %s37
    %s38 = sphi 0, %s35
    %s39 = sphi 0, %s38
    %s55 = sphi 0, %s39
    %s63 = sphi 0, %s65
    %s66 = sphi 0, %s63
    %s67 = sphi 0, %s66
    %s83 = sphi 0, %s67
    %s89 = sphi 0, %s91
    %s92 = sphi 0, %s89
    %s93 = sphi 0, %s92
    %s109 = sphi 0, %s93
    %s115 = sphi 0, %s117
    %s118 = sphi 0, %s115
    %s119 = sphi 0, %s118
    %s135 = sphi 0, %s119
    %s141 = sphi 0, %s143
    %s144 = sphi 0, %s141
    %s145 = sphi 0, %s144
    %s161 = sphi 0, %s145
    %s169 = sphi 0, %s171
    %s172 = sphi 0, %s169
    %s173 = sphi 0, %s172
    %s189 = sphi 0, %s173
  $region4: #{tpu_custom_call.1} parent=0 // loop_header_branch
    %14 = sbr.rel (%p12) target = $region8
  $region5: #{tpu_custom_call.1} parent=0 // loop_body
    %s16 = ssub.s32 %s11, 1
    %s17 = ssub.s32 %s11, 2
    %s24 = sadd.s32 1, %s19
    %p25 = scmp.ge.s32.totalorder %s24, 1
    %s26 = scalar_select %p25, 0, %s24
    %s27 = sadd.s32 1, %s18
    %s28 = scalar_select %p25, %s27, %s18
    %p29 = scmp.ge.s32.totalorder %s28, 2
    %s30 = scalar_select %p29, 0, %s28
    %s31 = ssub.s32 %s18, %s30
    %s32 = ssub.s32 %s19, %s26
    %s33 = sor.u32 %s31, %s32
    %p34 = scmp.eq.s32.totalorder %s33, 0
    %s36 = sadd.s32 %s35, 1
    %s37 = scalar_select %p34, %s35, %s36
    %p40 = pneg %p34
    %p41 = scmp.eq.s32.totalorder %s11, 1
    %p42 = por %p40, %p41
    %p43 = scmp.ne.s32.totalorder %s35, %s38
    %p44 = scmp.eq.s32.totalorder %s11, 0
    %p45 = por %p43, %p44
    %p46 = scmp.ne.s32.totalorder %s35, %s38
    %p47 = scmp.eq.s32.totalorder %s16, 1
    %p48 = por %p46, %p47
    %p49 = scmp.ne.s32.totalorder %s38, %s39
    %p50 = scmp.eq.s32.totalorder %s16, 0
    %p51 = por %p49, %p50
    %p52 = scmp.ne.s32.totalorder %s38, %s39
    %p53 = scmp.eq.s32.totalorder %s17, 1
    %p54 = por %p52, %p53
    %p56 = scmp.ne.s32.totalorder %s39, %s55
    %p57 = scmp.eq.s32.totalorder %s17, 0
    %p58 = por %p56, %p57
    %s59 = ssub.s32 %s18, %s30
    %s60 = ssub.s32 %s19, %s26
    %s61 = sor.u32 %s59, %s60
    %p62 = scmp.eq.s32.totalorder %s61, 0
    %s64 = sadd.s32 %s63, 1
    %s65 = scalar_select %p62, %s63, %s64
    %p68 = pneg %p62
    %p69 = scmp.eq.s32.totalorder %s11, 1
    %p70 = por %p68, %p69
    %p71 = scmp.ne.s32.totalorder %s63, %s66
    %p72 = scmp.eq.s32.totalorder %s11, 0
    %p73 = por %p71, %p72
    %p74 = scmp.ne.s32.totalorder %s63, %s66
    %p75 = scmp.eq.s32.totalorder %s16, 1
    %p76 = por %p74, %p75
    %p77 = scmp.ne.s32.totalorder %s66, %s67
    %p78 = scmp.eq.s32.totalorder %s16, 0
    %p79 = por %p77, %p78
    %p80 = scmp.ne.s32.totalorder %s66, %s67
    %p81 = scmp.eq.s32.totalorder %s17, 1
    %p82 = por %p80, %p81
    %p84 = scmp.ne.s32.totalorder %s67, %s83
    %p85 = scmp.eq.s32.totalorder %s17, 0
    %p86 = por %p84, %p85
    %s87 = ssub.s32 %s18, %s30
    %p88 = scmp.eq.s32.totalorder %s87, 0
    %s90 = sadd.s32 %s89, 1
    %s91 = scalar_select %p88, %s89, %s90
    %p94 = pneg %p88
    %p95 = scmp.eq.s32.totalorder %s11, 1
    %p96 = por %p94, %p95
    %p97 = scmp.ne.s32.totalorder %s89, %s92
    %p98 = scmp.eq.s32.totalorder %s11, 0
    %p99 = por %p97, %p98
    %p100 = scmp.ne.s32.totalorder %s89, %s92
    %p101 = scmp.eq.s32.totalorder %s16, 1
    %p102 = por %p100, %p101
    %p103 = scmp.ne.s32.totalorder %s92, %s93
    %p104 = scmp.eq.s32.totalorder %s16, 0
    %p105 = por %p103, %p104
    %p106 = scmp.ne.s32.totalorder %s92, %s93
    %p107 = scmp.eq.s32.totalorder %s17, 1
    %p108 = por %p106, %p107
    %p110 = scmp.ne.s32.totalorder %s93, %s109
    %p111 = scmp.eq.s32.totalorder %s17, 0
    %p112 = por %p110, %p111
    %s113 = ssub.s32 %s18, %s30
    %p114 = scmp.eq.s32.totalorder %s113, 0
    %s116 = sadd.s32 %s115, 1
    %s117 = scalar_select %p114, %s115, %s116
    %p120 = pneg %p114
    %p121 = scmp.eq.s32.totalorder %s11, 1
    %p122 = por %p120, %p121
    %p123 = scmp.ne.s32.totalorder %s115, %s118
    %p124 = scmp.eq.s32.totalorder %s11, 0
    %p125 = por %p123, %p124
    %p126 = scmp.ne.s32.totalorder %s115, %s118
    %p127 = scmp.eq.s32.totalorder %s16, 1
    %p128 = por %p126, %p127
    %p129 = scmp.ne.s32.totalorder %s118, %s119
    %p130 = scmp.eq.s32.totalorder %s16, 0
    %p131 = por %p129, %p130
    %p132 = scmp.ne.s32.totalorder %s118, %s119
    %p133 = scmp.eq.s32.totalorder %s17, 1
    %p134 = por %p132, %p133
    %p136 = scmp.ne.s32.totalorder %s119, %s135
    %p137 = scmp.eq.s32.totalorder %s17, 0
    %p138 = por %p136, %p137
    %s139 = ssub.s32 %s18, %s30
    %p140 = scmp.eq.s32.totalorder %s139, 0
    %s142 = sadd.s32 %s141, 1
    %s143 = scalar_select %p140, %s141, %s142
    %p146 = pneg %p140
    %p147 = scmp.eq.s32.totalorder %s11, 1
    %p148 = por %p146, %p147
    %p149 = scmp.ne.s32.totalorder %s141, %s144
    %p150 = scmp.eq.s32.totalorder %s11, 0
    %p151 = por %p149, %p150
    %p152 = scmp.ne.s32.totalorder %s141, %s144
    %p153 = scmp.eq.s32.totalorder %s16, 1
    %p154 = por %p152, %p153
    %p155 = scmp.ne.s32.totalorder %s144, %s145
    %p156 = scmp.eq.s32.totalorder %s16, 0
    %p157 = por %p155, %p156
    %p158 = scmp.ne.s32.totalorder %s144, %s145
    %p159 = scmp.eq.s32.totalorder %s17, 1
    %p160 = por %p158, %p159
    %p162 = scmp.ne.s32.totalorder %s145, %s161
    %p163 = scmp.eq.s32.totalorder %s17, 0
    %p164 = por %p162, %p163
    %s165 = ssub.s32 %s18, %s30
    %s166 = ssub.s32 %s19, %s26
    %s167 = sor.u32 %s165, %s166
    %p168 = scmp.eq.s32.totalorder %s167, 0
    %s170 = sadd.s32 %s169, 1
    %s171 = scalar_select %p168, %s169, %s170
    %p174 = pneg %p168
    %p175 = scmp.eq.s32.totalorder %s11, 1
    %p176 = por %p174, %p175
    %p177 = scmp.ne.s32.totalorder %s169, %s172
    %p178 = scmp.eq.s32.totalorder %s11, 0
    %p179 = por %p177, %p178
    %p180 = scmp.ne.s32.totalorder %s169, %s172
    %p181 = scmp.eq.s32.totalorder %s16, 1
    %p182 = por %p180, %p181
    %p183 = scmp.ne.s32.totalorder %s172, %s173
    %p184 = scmp.eq.s32.totalorder %s16, 0
    %p185 = por %p183, %p184
    %p186 = scmp.ne.s32.totalorder %s172, %s173
    %p187 = scmp.eq.s32.totalorder %s17, 1
    %p188 = por %p186, %p187
    %p190 = scmp.ne.s32.totalorder %s173, %s189
    %p191 = scmp.eq.s32.totalorder %s17, 0
    %p192 = por %p190, %p191
    %p193 = scmp.le.s32.totalorder 1, %s11
    %p194 = scmp.lt.s32.totalorder %s11, 3
    %p195 = pnand %p193, %p194
    %p196 = pneg %p195
    // Predicated region
    $region9: #{tpu_custom_call.1} parent=5 // pred_check
      _
    $region10: #{tpu_custom_call.1} parent=5 // pred_check_branch
      %198 = sbr.rel (%p195) target = $region12
    $region11: #{tpu_custom_call.1} parent=5 // pred_region
      %s199 = ssub.s32 %s11, 1
    $region12: #{tpu_custom_call.1} parent=5 // pred_fallthru
      _
    %p200 = scmp.lt.s32.totalorder %s11, 2
    // Predicated region
    $region13: #{tpu_custom_call.1} parent=5 // pred_check
      %p201 = pneg %p200
    $region14: #{tpu_custom_call.1} parent=5 // pred_check_branch
      %203 = sbr.rel (%p201) target = $region16
    $region15: #{tpu_custom_call.1} parent=5 // pred_region
      // Predicated region
      $region17: #{tpu_custom_call.1} parent=15 // pred_check
        %p204 = pneg %p45
      $region18: #{tpu_custom_call.1} parent=15 // pred_check_branch
        %206 = sbr.rel (%p204) target = $region20
      $region19: #{tpu_custom_call.1} parent=15 // pred_region
        %s207 = smul.u32 4, %s19
        %p208 = scmp.lt.s32.totalorder %s18, 1
        %s209 = scalar_select %p208, %s18, 1
        %p210 = scmp.lt.s32.totalorder %s207, 3
        %s211 = scalar_select %p210, %s207, 3
        %s212 = smul.addr %s209, 4
        %s213 = sadd.s32 %s211, %s212
        %s214 = smul.addr %s213, 8
        %s215 = scalar_lea.vmem %s0, %s214
        %s216 = smul.u32 4, %s19
      $region20: #{tpu_custom_call.1} parent=15 // pred_fallthru
        _
      // Predicated region
      $region21: #{tpu_custom_call.1} parent=15 // pred_check
        %p217 = pneg %p73
      $region22: #{tpu_custom_call.1} parent=15 // pred_check_branch
        %219 = sbr.rel (%p217) target = $region24
      $region23: #{tpu_custom_call.1} parent=15 // pred_region
        %s220 = smul.u32 4, %s19
        %p221 = scmp.lt.s32.totalorder %s18, 1
        %s222 = scalar_select %p221, %s18, 1
        %p223 = scmp.lt.s32.totalorder %s220, 3
        %s224 = scalar_select %p223, %s220, 3
        %s225 = smul.addr %s222, 4
        %s226 = sadd.s32 %s224, %s225
        %s227 = smul.addr %s226, 8
        %s228 = scalar_lea.vmem %s1, %s227
        %s229 = smul.u32 4, %s19
      $region24: #{tpu_custom_call.1} parent=15 // pred_fallthru
        _
      // Predicated region
      $region25: #{tpu_custom_call.1} parent=15 // pred_check
        %p230 = pneg %p99
      $region26: #{tpu_custom_call.1} parent=15 // pred_check_branch
        %232 = sbr.rel (%p230) target = $region28
      $region27: #{tpu_custom_call.1} parent=15 // pred_region
        %p233 = scmp.lt.s32.totalorder %s18, 1
        %s234 = scalar_select %p233, %s18, 1
        %s235 = smul.addr %s234, 4
        %s236 = scalar_lea.vmem %s2, %s235
      $region28: #{tpu_custom_call.1} parent=15 // pred_fallthru
        _
      // Predicated region
      $region29: #{tpu_custom_call.1} parent=15 // pred_check
        %p237 = pneg %p125
      $region30: #{tpu_custom_call.1} parent=15 // pred_check_branch
        %239 = sbr.rel (%p237) target = $region32
      $region31: #{tpu_custom_call.1} parent=15 // pred_region
        %p240 = scmp.lt.s32.totalorder %s18, 1
        %s241 = scalar_select %p240, %s18, 1
        %s242 = scalar_lea.vmem %s3, %s241
      $region32: #{tpu_custom_call.1} parent=15 // pred_fallthru
        _
      // Predicated region
      $region33: #{tpu_custom_call.1} parent=15 // pred_check
        %p243 = pneg %p151
      $region34: #{tpu_custom_call.1} parent=15 // pred_check_branch
        %245 = sbr.rel (%p243) target = $region36
      $region35: #{tpu_custom_call.1} parent=15 // pred_region
        %p246 = scmp.lt.s32.totalorder %s18, 1
        %s247 = scalar_select %p246, %s18, 1
        %s248 = smul.addr %s247, 2
        %s249 = smul.addr %s248, 4
        %s250 = scalar_lea.vmem %s4, %s249
      $region36: #{tpu_custom_call.1} parent=15 // pred_fallthru
        _
    $region16: #{tpu_custom_call.1} parent=5 // pred_fallthru
      _
    %p251 = scmp.le.s32.totalorder 1, %s11
    %p252 = scmp.lt.s32.totalorder %s11, 3
    %p253 = pnand %p251, %p252
    %p254 = pneg %p253
    // Predicated region
    $region37: #{tpu_custom_call.1} parent=5 // pred_check
      _
    $region38: #{tpu_custom_call.1} parent=5 // pred_check_branch
      %256 = sbr.rel (%p253) target = $region40
    $region39: #{tpu_custom_call.1} parent=5 // pred_region
      %s257 = ssub.s32 %s11, 1
      %s258 = smul.u32 4, %s21
      %p259 = scmp.lt.s32.totalorder %s20, 1
      %s260 = scalar_select %p259, %s20, 1
      %p261 = scmp.lt.s32.totalorder %s258, 3
      %s262 = scalar_select %p261, %s258, 3
      %s263 = smul.addr %s260, 4
      %s264 = sadd.s32 %s262, %s263
      %s265 = smul.addr %s264, 8
      %s266 = scalar_lea.vmem %s0, %s265
      %p267 = pneg %p51
      %p268 = pneg %p48
      %s269 = smul.u32 4, %s21
      %p270 = scmp.lt.s32.totalorder %s20, 1
      %s271 = scalar_select %p270, %s20, 1
      %p272 = scmp.lt.s32.totalorder %s269, 3
      %s273 = scalar_select %p272, %s269, 3
      %s274 = smul.addr %s271, 4
      %s275 = sadd.s32 %s273, %s274
      %s276 = smul.addr %s275, 8
      %s277 = scalar_lea.vmem %s1, %s276
      %p278 = pneg %p79
      %p279 = pneg %p76
      %p280 = scmp.lt.s32.totalorder %s20, 1
      %s281 = scalar_select %p280, %s20, 1
      %s282 = smul.addr %s281, 4
      %s283 = scalar_lea.vmem %s2, %s282
      %p284 = pneg %p105
      %p285 = pneg %p102
      %p286 = scmp.lt.s32.totalorder %s20, 1
      %s287 = scalar_select %p286, %s20, 1
      %s288 = scalar_lea.vmem %s3, %s287
      %p289 = pneg %p131
      %p290 = pneg %p128
      %p291 = scmp.lt.s32.totalorder %s20, 1
      %s292 = scalar_select %p291, %s20, 1
      %s293 = smul.addr %s292, 2
      %s294 = smul.addr %s293, 4
      %s295 = scalar_lea.vmem %s4, %s294
      %p296 = pneg %p157
      %p297 = pneg %p154
      %p298 = pneg %p185
      %p299 = pneg %p182
      %s300 = smul.u32 4, %s21
      %p301 = scmp.lt.s32.totalorder %s20, 1
      %s302 = scalar_select %p301, %s20, 1
      %p303 = scmp.lt.s32.totalorder %s300, 3
      %s304 = scalar_select %p303, %s300, 3
      %s305 = smul.addr %s302, 4
      %s306 = sadd.s32 %s304, %s305
      %s307 = smul.addr %s306, 8
      %s308 = scalar_lea.vmem %s5, %s307
      %s309 = smul.u32 4, %s21
      %p310 = scmp.lt.s32.totalorder %s20, 1
      %s311 = scalar_select %p310, %s20, 1
      %p312 = scmp.lt.s32.totalorder %s309, 3
      %s313 = scalar_select %p312, %s309, 3
      %s314 = smul.addr %s311, 4
      %s315 = sadd.s32 %s313, %s314
      %s316 = smul.addr %s315, 8
      %s317 = scalar_lea.vmem %s0, %s316
      %s318 = smul.u32 4, %s21
      %s319 = smul.u32 4, %s21
      %p320 = scmp.lt.s32.totalorder %s20, 1
      %s321 = scalar_select %p320, %s20, 1
      %p322 = scmp.lt.s32.totalorder %s319, 3
      %s323 = scalar_select %p322, %s319, 3
      %s324 = smul.addr %s321, 4
      %s325 = sadd.s32 %s323, %s324
      %s326 = smul.addr %s325, 8
      %s327 = scalar_lea.vmem %s1, %s326
      %s328 = smul.u32 4, %s21
      %p329 = scmp.lt.s32.totalorder %s20, 1
      %s330 = scalar_select %p329, %s20, 1
      %s331 = smul.addr %s330, 4
      %s332 = scalar_lea.vmem %s2, %s331
      %p333 = scmp.lt.s32.totalorder %s20, 1
      %s334 = scalar_select %p333, %s20, 1
      %s335 = scalar_lea.vmem %s3, %s334
      %p336 = scmp.lt.s32.totalorder %s20, 1
      %s337 = scalar_select %p336, %s20, 1
      %s338 = smul.addr %s337, 2
      %s339 = smul.addr %s338, 4
      %s340 = scalar_lea.vmem %s4, %s339
      %s341 = smul.u32 4, %s21
      %p342 = scmp.lt.s32.totalorder %s20, 1
      %s343 = scalar_select %p342, %s20, 1
      %p344 = scmp.lt.s32.totalorder %s341, 3
      %s345 = scalar_select %p344, %s341, 3
      %s346 = smul.addr %s343, 4
      %s347 = sadd.s32 %s345, %s346
      %s348 = smul.addr %s347, 8
      %s349 = scalar_lea.vmem %s5, %s348
      %s350 = smul.u32 4, %s21
      %v352 = vld [vmem:[%s317] sm:$0xff]
      %v353 = vld [vmem:[%s317 + $0x8] sm:$0xff]
      %v354 = vld [vmem:[%s317 + $0x10] sm:$0xff]
      %v355 = vld [vmem:[%s317 + $0x18] sm:$0xff]
      %v356 = vld [vmem:[%s332] sm:$0x7]
      %358 = vset.pattern.permute.xlu0 0
      %359 = vperm.xlu0 %358, %v352
      %v360 = vpop.permute.xlu0 %359
      %363 = vset.pattern.permute.xlu0 0
      %364 = vperm.xlu0 %363, %v353
      %v365 = vpop.permute.xlu0 %364
      %368 = vset.pattern.permute.xlu0 0
      %369 = vperm.xlu0 %368, %v354
      %v370 = vpop.permute.xlu0 %369
      %373 = vset.pattern.permute.xlu0 0
      %374 = vperm.xlu0 %373, %v355
      %v375 = vpop.permute.xlu0 %374
      %v377 = vlaneseq
      %v378 = vshrl.u32 %v377, 7
      %v379 = vsub.s32 0, %v378
      %v380 = vrot.slane %v356, %v379
      %v381 = vsub.f32 %v360, %v380
      %v382 = vsub.f32 %v365, %v380
      %v383 = vsub.f32 %v370, %v380
      %v384 = vsub.f32 %v375, %v380
      %v385 = vmul.f32 %v381, %v381
      %v386 = vmul.f32 %v382, %v382
      %v387 = vmul.f32 %v383, %v383
      %v388 = vmul.f32 %v384, %v384
      %v389 = vadd.f32 %v385, 0.0
      %v390 = vadd.f32 %v386, 0.0
      %v391 = vadd.f32 %v387, 0.0
      %v392 = vadd.f32 %v388, 0.0
      %393 = vset.pattern.permute.xlu0 1
      %394 = vperm.xlu0 %393, %v352
      %v395 = vpop.permute.xlu0 %394
      %397 = vset.pattern.permute.xlu0 1
      %398 = vperm.xlu0 %397, %v353
      %v399 = vpop.permute.xlu0 %398
      %401 = vset.pattern.permute.xlu0 1
      %402 = vperm.xlu0 %401, %v354
      %v403 = vpop.permute.xlu0 %402
      %405 = vset.pattern.permute.xlu0 1
      %406 = vperm.xlu0 %405, %v355
      %v407 = vpop.permute.xlu0 %406
      %v409 = vlaneseq
      %v410 = vshrl.u32 %v409, 7
      %v411 = vsub.s32 1, %v410
      %v412 = vrot.slane %v356, %v411
      %v413 = vsub.f32 %v395, %v412
      %v414 = vsub.f32 %v399, %v412
      %v415 = vsub.f32 %v403, %v412
      %v416 = vsub.f32 %v407, %v412
      %v417 = vmul.f32 %v413, %v413
      %v418 = vmul.f32 %v414, %v414
      %v419 = vmul.f32 %v415, %v415
      %v420 = vmul.f32 %v416, %v416
      %v421 = vadd.f32 %v389, %v417
      %v422 = vadd.f32 %v390, %v418
      %v423 = vadd.f32 %v391, %v419
      %v424 = vadd.f32 %v392, %v420
      %425 = vset.pattern.permute.xlu0 2
      %426 = vperm.xlu0 %425, %v352
      %v427 = vpop.permute.xlu0 %426
      %429 = vset.pattern.permute.xlu0 2
      %430 = vperm.xlu0 %429, %v353
      %v431 = vpop.permute.xlu0 %430
      %433 = vset.pattern.permute.xlu0 2
      %434 = vperm.xlu0 %433, %v354
      %v435 = vpop.permute.xlu0 %434
      %437 = vset.pattern.permute.xlu0 2
      %438 = vperm.xlu0 %437, %v355
      %v439 = vpop.permute.xlu0 %438
      %v441 = vlaneseq
      %v442 = vshrl.u32 %v441, 7
      %v443 = vsub.s32 2, %v442
      %v444 = vrot.slane %v356, %v443
      %v445 = vsub.f32 %v427, %v444
      %v446 = vsub.f32 %v431, %v444
      %v447 = vsub.f32 %v435, %v444
      %v448 = vsub.f32 %v439, %v444
      %v449 = vmul.f32 %v445, %v445
      %v450 = vmul.f32 %v446, %v446
      %v451 = vmul.f32 %v447, %v447
      %v452 = vmul.f32 %v448, %v448
      %v453 = vadd.f32 %v421, %v449
      %v454 = vadd.f32 %v422, %v450
      %v455 = vadd.f32 %v423, %v451
      %v456 = vadd.f32 %v424, %v452
      %v457 = vld [vmem:[%s327] sm:$0xff]
      %v458 = vld [vmem:[%s327 + $0x8] sm:$0xff]
      %v459 = vld [vmem:[%s327 + $0x10] sm:$0xff]
      %v460 = vld [vmem:[%s327 + $0x18] sm:$0xff]
      %v461 = vld [vmem:[%s335] sm:$0x1]
      %462 = vset.pattern.permute.xlu0 0
      %463 = vperm.xlu0 %462, %v457
      %v464 = vpop.permute.xlu0 %463
      %465 = vset.pattern.permute.xlu0 0
      %466 = vperm.xlu0 %465, %v458
      %v467 = vpop.permute.xlu0 %466
      %468 = vset.pattern.permute.xlu0 0
      %469 = vperm.xlu0 %468, %v459
      %v470 = vpop.permute.xlu0 %469
      %471 = vset.pattern.permute.xlu0 0
      %472 = vperm.xlu0 %471, %v460
      %v473 = vpop.permute.xlu0 %472
      %v474 = vlaneseq
      %v475 = vshrl.u32 %v474, 7
      %v476 = vsub.s32 0, %v475
      %v477 = vrot.slane %v461, %v476
      %vm478 = vcmp.eq.s32.totalorder %v464, %v477
      %vm479 = vcmp.eq.s32.totalorder %v467, %v477
      %vm480 = vcmp.eq.s32.totalorder %v470, %v477
      %vm481 = vcmp.eq.s32.totalorder %v473, %v477
      %v482 = vsel %vm478, %v453, 1e+30
      %v483 = vsel %vm479, %v454, 1e+30
      %v484 = vsel %vm480, %v455, 1e+30
      %v485 = vsel %vm481, %v456, 1e+30
      %v486 = vlaneseq
      %v487 = vand.u32 %v486, 127
      %v492 = vand.u32 %v482, 4294967280
      %v493 = vand.u32 %v483, 4294967280
      %v494 = vand.u32 %v484, 4294967280
      %v495 = vand.u32 %v485, 4294967280
      %v496 = vor.u32 %v492, %v487
      %v497 = vor.u32 %v493, %v487
      %v498 = vor.u32 %v494, %v487
      %v499 = vor.u32 %v495, %v487
      %vm500 = vcmask 130048
      %v501 = vsel %vm500, %v496, 2147483647
      %v502 = vand.u32 %v501, 65535
      %v503 = vshra.s32 %v501, 16
      %v504 = vcvt.s32.f32 %v502
      %v505 = vcvt.s32.f32 %v503
      %506 = vmin.xlane.f32.xlu0 %v505
      %v507 = vpop.xlane.xlu0 %506
      %vm508 = vcmp.eq.f32.partialorder %v505, %v507
      %v509 = vsel %vm508, %v504, inf
      %510 = vmin.xlane.f32.xlu0 %v509
      %v511 = vpop.xlane.xlu0 %510
      %v512 = vcvt.f32.s32 %v511
      %v513 = vcvt.f32.s32 %v507
      %v514 = vshll.u32 %v513, 16
      %v515 = vadd.s32 %v514, %v512
      %v516 = vsel %vm500, %v497, 2147483647
      %v517 = vand.u32 %v516, 65535
      %v518 = vshra.s32 %v516, 16
      %v519 = vcvt.s32.f32 %v517
      %v520 = vcvt.s32.f32 %v518
      %521 = vmin.xlane.f32.xlu0 %v520
      %v522 = vpop.xlane.xlu0 %521
      %vm523 = vcmp.eq.f32.partialorder %v520, %v522
      %v524 = vsel %vm523, %v519, inf
      %525 = vmin.xlane.f32.xlu0 %v524
      %v526 = vpop.xlane.xlu0 %525
      %v527 = vcvt.f32.s32 %v526
      %v528 = vcvt.f32.s32 %v522
      %v529 = vshll.u32 %v528, 16
      %v530 = vadd.s32 %v529, %v527
      %v531 = vsel %vm500, %v498, 2147483647
      %v532 = vand.u32 %v531, 65535
      %v533 = vshra.s32 %v531, 16
      %v534 = vcvt.s32.f32 %v532
      %v535 = vcvt.s32.f32 %v533
      %536 = vmin.xlane.f32.xlu0 %v535
      %v537 = vpop.xlane.xlu0 %536
      %vm538 = vcmp.eq.f32.partialorder %v535, %v537
      %v539 = vsel %vm538, %v534, inf
      %540 = vmin.xlane.f32.xlu0 %v539
      %v541 = vpop.xlane.xlu0 %540
      %v542 = vcvt.f32.s32 %v541
      %v543 = vcvt.f32.s32 %v537
      %v544 = vshll.u32 %v543, 16
      %v545 = vadd.s32 %v544, %v542
      %v546 = vsel %vm500, %v499, 2147483647
      %v547 = vand.u32 %v546, 65535
      %v548 = vshra.s32 %v546, 16
      %v549 = vcvt.s32.f32 %v547
      %v550 = vcvt.s32.f32 %v548
      %551 = vmin.xlane.f32.xlu0 %v550
      %v552 = vpop.xlane.xlu0 %551
      %vm553 = vcmp.eq.f32.partialorder %v550, %v552
      %v554 = vsel %vm553, %v549, inf
      %555 = vmin.xlane.f32.xlu0 %v554
      %v556 = vpop.xlane.xlu0 %555
      %v557 = vcvt.f32.s32 %v556
      %v558 = vcvt.f32.s32 %v552
      %v559 = vshll.u32 %v558, 16
      %v560 = vadd.s32 %v559, %v557
      %v561 = vand.u32 %v515, 4294967280
      %v562 = vand.u32 %v530, 4294967280
      %v563 = vand.u32 %v545, 4294967280
      %v564 = vand.u32 %v560, 4294967280
      %v569 = vmax.f32 %v561, 1e-16
      %v570 = vmax.f32 %v562, 1e-16
      %v571 = vmax.f32 %v563, 1e-16
      %v572 = vmax.f32 %v564, 1e-16
      %v573 = vrcp.pop %v569
      %v574 = vrcp.pop %v570
      %v575 = vrcp.pop %v571
      %v576 = vrcp.pop %v572
      %vm577 = vcmp.eq.s32.totalorder %v496, %v515
      %vm578 = vcmp.eq.s32.totalorder %v497, %v530
      %vm579 = vcmp.eq.s32.totalorder %v498, %v545
      %vm580 = vcmp.eq.s32.totalorder %v499, %v560
      %v581 = vsel %vm577, %v573, 0.0
      %v582 = vsel %vm578, %v574, 0.0
      %v583 = vsel %vm579, %v575, 0.0
      %v584 = vsel %vm580, %v576, 0.0
      %v585 = vadd.f32 %v581, 0.0
      %v586 = vadd.f32 %v582, 0.0
      %v587 = vadd.f32 %v583, 0.0
      %v588 = vadd.f32 %v584, 0.0
      %v589 = vsel %vm577, 2130706432, %v496
      %v590 = vsel %vm578, 2130706432, %v497
      %v591 = vsel %vm579, 2130706432, %v498
      %v592 = vsel %vm580, 2130706432, %v499
      %v593 = vsel %vm500, %v589, 2147483647
      %v594 = vand.u32 %v593, 65535
      %v595 = vshra.s32 %v593, 16
      %v596 = vcvt.s32.f32 %v594
      %v597 = vcvt.s32.f32 %v595
      %598 = vmin.xlane.f32.xlu0 %v597
      %v599 = vpop.xlane.xlu0 %598
      %vm600 = vcmp.eq.f32.partialorder %v597, %v599
      %v601 = vsel %vm600, %v596, inf
      %602 = vmin.xlane.f32.xlu0 %v601
      %v603 = vpop.xlane.xlu0 %602
      %v604 = vcvt.f32.s32 %v603
      %v605 = vcvt.f32.s32 %v599
      %v606 = vshll.u32 %v605, 16
      %v607 = vadd.s32 %v606, %v604
      %v608 = vsel %vm500, %v590, 2147483647
      %v609 = vand.u32 %v608, 65535
      %v610 = vshra.s32 %v608, 16
      %v611 = vcvt.s32.f32 %v609
      %v612 = vcvt.s32.f32 %v610
      %613 = vmin.xlane.f32.xlu0 %v612
      %v614 = vpop.xlane.xlu0 %613
      %vm615 = vcmp.eq.f32.partialorder %v612, %v614
      %v616 = vsel %vm615, %v611, inf
      %617 = vmin.xlane.f32.xlu0 %v616
      %v618 = vpop.xlane.xlu0 %617
      %v619 = vcvt.f32.s32 %v618
      %v620 = vcvt.f32.s32 %v614
      %v621 = vshll.u32 %v620, 16
      %v622 = vadd.s32 %v621, %v619
      %v623 = vsel %vm500, %v591, 2147483647
      %v624 = vand.u32 %v623, 65535
      %v625 = vshra.s32 %v623, 16
      %v626 = vcvt.s32.f32 %v624
      %v627 = vcvt.s32.f32 %v625
      %628 = vmin.xlane.f32.xlu0 %v627
      %v629 = vpop.xlane.xlu0 %628
      %vm630 = vcmp.eq.f32.partialorder %v627, %v629
      %v631 = vsel %vm630, %v626, inf
      %632 = vmin.xlane.f32.xlu0 %v631
      %v633 = vpop.xlane.xlu0 %632
      %v634 = vcvt.f32.s32 %v633
      %v635 = vcvt.f32.s32 %v629
      %v636 = vshll.u32 %v635, 16
      %v637 = vadd.s32 %v636, %v634
      %v638 = vsel %vm500, %v592, 2147483647
      %v639 = vand.u32 %v638, 65535
      %v640 = vshra.s32 %v638, 16
      %v641 = vcvt.s32.f32 %v639
      %v642 = vcvt.s32.f32 %v640
      %643 = vmin.xlane.f32.xlu0 %v642
      %v644 = vpop.xlane.xlu0 %643
      %vm645 = vcmp.eq.f32.partialorder %v642, %v644
      %v646 = vsel %vm645, %v641, inf
      %647 = vmin.xlane.f32.xlu0 %v646
      %v648 = vpop.xlane.xlu0 %647
      %v649 = vcvt.f32.s32 %v648
      %v650 = vcvt.f32.s32 %v644
      %v651 = vshll.u32 %v650, 16
      %v652 = vadd.s32 %v651, %v649
      %v653 = vand.u32 %v607, 4294967280
      %v654 = vand.u32 %v622, 4294967280
      %v655 = vand.u32 %v637, 4294967280
      %v656 = vand.u32 %v652, 4294967280
      %v661 = vmax.f32 %v653, 1e-16
      %v662 = vmax.f32 %v654, 1e-16
      %v663 = vmax.f32 %v655, 1e-16
      %v664 = vmax.f32 %v656, 1e-16
      %v665 = vrcp.pop %v661
      %v666 = vrcp.pop %v662
      %v667 = vrcp.pop %v663
      %v668 = vrcp.pop %v664
      %vm669 = vcmp.eq.s32.totalorder %v589, %v607
      %vm670 = vcmp.eq.s32.totalorder %v590, %v622
      %vm671 = vcmp.eq.s32.totalorder %v591, %v637
      %vm672 = vcmp.eq.s32.totalorder %v592, %v652
      %v673 = vsel %vm669, %v665, 0.0
      %v674 = vsel %vm670, %v666, 0.0
      %v675 = vsel %vm671, %v667, 0.0
      %v676 = vsel %vm672, %v668, 0.0
      %v677 = vadd.f32 %v585, %v673
      %v678 = vadd.f32 %v586, %v674
      %v679 = vadd.f32 %v587, %v675
      %v680 = vadd.f32 %v588, %v676
      %v681 = vsel %vm669, 2130706432, %v589
      %v682 = vsel %vm670, 2130706432, %v590
      %v683 = vsel %vm671, 2130706432, %v591
      %v684 = vsel %vm672, 2130706432, %v592
      %v685 = vsel %vm500, %v681, 2147483647
      %v686 = vand.u32 %v685, 65535
      %v687 = vshra.s32 %v685, 16
      %v688 = vcvt.s32.f32 %v686
      %v689 = vcvt.s32.f32 %v687
      %690 = vmin.xlane.f32.xlu0 %v689
      %v691 = vpop.xlane.xlu0 %690
      %vm692 = vcmp.eq.f32.partialorder %v689, %v691
      %v693 = vsel %vm692, %v688, inf
      %694 = vmin.xlane.f32.xlu0 %v693
      %v695 = vpop.xlane.xlu0 %694
      %v696 = vcvt.f32.s32 %v695
      %v697 = vcvt.f32.s32 %v691
      %v698 = vshll.u32 %v697, 16
      %v699 = vadd.s32 %v698, %v696
      %v700 = vsel %vm500, %v682, 2147483647
      %v701 = vand.u32 %v700, 65535
      %v702 = vshra.s32 %v700, 16
      %v703 = vcvt.s32.f32 %v701
      %v704 = vcvt.s32.f32 %v702
      %705 = vmin.xlane.f32.xlu0 %v704
      %v706 = vpop.xlane.xlu0 %705
      %vm707 = vcmp.eq.f32.partialorder %v704, %v706
      %v708 = vsel %vm707, %v703, inf
      %709 = vmin.xlane.f32.xlu0 %v708
      %v710 = vpop.xlane.xlu0 %709
      %v711 = vcvt.f32.s32 %v710
      %v712 = vcvt.f32.s32 %v706
      %v713 = vshll.u32 %v712, 16
      %v714 = vadd.s32 %v713, %v711
      %v715 = vsel %vm500, %v683, 2147483647
      %v716 = vand.u32 %v715, 65535
      %v717 = vshra.s32 %v715, 16
      %v718 = vcvt.s32.f32 %v716
      %v719 = vcvt.s32.f32 %v717
      %720 = vmin.xlane.f32.xlu0 %v719
      %v721 = vpop.xlane.xlu0 %720
      %vm722 = vcmp.eq.f32.partialorder %v719, %v721
      %v723 = vsel %vm722, %v718, inf
      %724 = vmin.xlane.f32.xlu0 %v723
      %v725 = vpop.xlane.xlu0 %724
      %v726 = vcvt.f32.s32 %v725
      %v727 = vcvt.f32.s32 %v721
      %v728 = vshll.u32 %v727, 16
      %v729 = vadd.s32 %v728, %v726
      %v730 = vsel %vm500, %v684, 2147483647
      %v731 = vand.u32 %v730, 65535
      %v732 = vshra.s32 %v730, 16
      %v733 = vcvt.s32.f32 %v731
      %v734 = vcvt.s32.f32 %v732
      %735 = vmin.xlane.f32.xlu0 %v734
      %v736 = vpop.xlane.xlu0 %735
      %vm737 = vcmp.eq.f32.partialorder %v734, %v736
      %v738 = vsel %vm737, %v733, inf
      %739 = vmin.xlane.f32.xlu0 %v738
      %v740 = vpop.xlane.xlu0 %739
      %v741 = vcvt.f32.s32 %v740
      %v742 = vcvt.f32.s32 %v736
      %v743 = vshll.u32 %v742, 16
      %v744 = vadd.s32 %v743, %v741
      %v745 = vand.u32 %v699, 4294967280
      %v746 = vand.u32 %v714, 4294967280
      %v747 = vand.u32 %v729, 4294967280
      %v748 = vand.u32 %v744, 4294967280
      %v753 = vmax.f32 %v745, 1e-16
      %v754 = vmax.f32 %v746, 1e-16
      %v755 = vmax.f32 %v747, 1e-16
      %v756 = vmax.f32 %v748, 1e-16
      %v757 = vrcp.pop %v753
      %v758 = vrcp.pop %v754
      %v759 = vrcp.pop %v755
      %v760 = vrcp.pop %v756
      %vm761 = vcmp.eq.s32.totalorder %v681, %v699
      %vm762 = vcmp.eq.s32.totalorder %v682, %v714
      %vm763 = vcmp.eq.s32.totalorder %v683, %v729
      %vm764 = vcmp.eq.s32.totalorder %v684, %v744
      %v765 = vsel %vm761, %v757, 0.0
      %v766 = vsel %vm762, %v758, 0.0
      %v767 = vsel %vm763, %v759, 0.0
      %v768 = vsel %vm764, %v760, 0.0
      %v769 = vadd.f32 %v677, %v765
      %v770 = vadd.f32 %v678, %v766
      %v771 = vadd.f32 %v679, %v767
      %v772 = vadd.f32 %v680, %v768
      %v773 = vsel %vm500, %v769, 0.0
      %774 = vadd.xlane.f32.xlu0 %v773
      %v775 = vpop.xlane.xlu0 %774
      %v776 = vsel %vm500, %v770, 0.0
      %777 = vadd.xlane.f32.xlu0 %v776
      %v778 = vpop.xlane.xlu0 %777
      %v779 = vsel %vm500, %v771, 0.0
      %780 = vadd.xlane.f32.xlu0 %v779
      %v781 = vpop.xlane.xlu0 %780
      %v782 = vsel %vm500, %v772, 0.0
      %783 = vadd.xlane.f32.xlu0 %v782
      %v784 = vpop.xlane.xlu0 %783
      %v785 = vpack.c.bf16 %v770, %v769
      %v786 = vpack.c.bf16 %v772, %v771
      %v787 = vld [vmem:[%s340] sm:$0xf]
      %v788 = vld [vmem:[%s340 + $0x4] sm:$0xf]
      %v791 = vunpack.c.l.b16 %v787
      %v792 = vunpack.c.l.b16 %v788
      %v793 = vpack.c.b16 %v792, %v791
      %v796 = vsel %vm500, %v785, 0
      %v799 = vsel %vm500, %v786, 0
      %801 = vmatprep.subr.bf16.mxu0 0
      %802 = vmatpush1.bf16.msra.mxu0 0
      %803 = vmatprep.subr.bf16.mxu0 0
      %804 = vmatpush1.bf16.msra.mxu0 0
      %805 = vmatprep.subr.bf16.mxu0 0
      %806 = vmatpush1.bf16.msra.mxu0 0
      %807 = vmatprep.subr.bf16.mxu0 0
      %808 = vmatpush1.bf16.msra.mxu0 0
      %809 = vmatprep.subr.bf16.mxu0 0
      %810 = vmatpush1.bf16.msra.mxu0 0
      %811 = vmatprep.subr.bf16.mxu0 0
      %812 = vmatpush1.bf16.msra.mxu0 0
      %813 = vmatprep.subr.bf16.mxu0 0
      %814 = vmatpush1.bf16.msra.mxu0 0
      %815 = vmatprep.subr.bf16.mxu0 0
      %816 = vmatpush1.bf16.msra.mxu0 %v793
      %817 = vmatprep.subr.bf16.mxu0 0
      %818 = vmatpush2.bf16.msra.mxu0 0
      %819 = vmatprep.subr.bf16.mxu0 0
      %820 = vmatpush2.bf16.msra.mxu0 0
      %821 = vmatprep.subr.bf16.mxu0 0
      %822 = vmatpush2.bf16.msra.mxu0 0
      %823 = vmatprep.subr.bf16.mxu0 0
      %824 = vmatpush2.bf16.msra.mxu0 0
      %825 = vmatprep.subr.bf16.mxu0 0
      %826 = vmatpush2.bf16.msra.mxu0 0
      %827 = vmatprep.subr.bf16.mxu0 0
      %828 = vmatpush2.bf16.msra.mxu0 0
      %829 = vmatprep.subr.bf16.mxu0 0
      %830 = vmatpush2.bf16.msra.mxu0 0
      %831 = vmatprep.subr.bf16.mxu0 0
      %832 = vmatpush2.bf16.msra.mxu0 0
      %833 = vmatprep.mubr.bf16.mxu0 0
      %834 = vmatmul.mubr.bf16.gmra.mxu0 %v796
      %v835 = vpop.f32.mrf.mxu0
      %v836 = vadd.f32 0.0, %v835
      %v837 = vpop.f32.mrf.mxu0
      %v838 = vpop.f32.mrf.mxu0
      %v839 = vadd.f32 0.0, %v838
      %v840 = vpop.f32.mrf.mxu0
      %841 = vmatprep.mubr.bf16.mxu0 0
      %842 = vmatmul.mubr.bf16.gmra.mxu0 %v799
      %v843 = vpop.f32.mrf.mxu0
      %v844 = vadd.f32 0.0, %v843
      %v845 = vpop.f32.mrf.mxu0
      %v846 = vpop.f32.mrf.mxu0
      %v847 = vadd.f32 0.0, %v846
      %v848 = vpop.f32.mrf.mxu0
      %849 = vdwg.mxu0
      %v850 = vrcp.pop %v775
      %v851 = vrcp.pop %v778
      %v852 = vrcp.pop %v781
      %v853 = vrcp.pop %v784
      %v854 = vmul.f32 %v836, %v850
      %v855 = vmul.f32 %v839, %v851
      %v856 = vmul.f32 %v844, %v852
      %v857 = vmul.f32 %v847, %v853
      %vm858 = vcmask 31744
      %859 = vst.msk [vmem:[%s349] sm:$0xff] %vm858, %v854
      %860 = vst.msk [vmem:[%s349 + $0x8] sm:$0xff] %vm858, %v855
      %861 = vst.msk [vmem:[%s349 + $0x10] sm:$0xff] %vm858, %v856
      %862 = vst.msk [vmem:[%s349 + $0x18] sm:$0xff] %vm858, %v857
      %s863 = smul.u32 4, %s21
      %p864 = scmp.lt.s32.totalorder %s20, 1
      %s865 = scalar_select %p864, %s20, 1
      %p866 = scmp.lt.s32.totalorder %s863, 3
      %s867 = scalar_select %p866, %s863, 3
      %s868 = smul.addr %s865, 4
      %s869 = sadd.s32 %s867, %s868
      %s870 = smul.addr %s869, 8
      %s871 = scalar_lea.vmem %s5, %s870
      // Predicated region
      $region41: #{tpu_custom_call.1} parent=39 // pred_check
        %p872 = pneg %p182
      $region42: #{tpu_custom_call.1} parent=39 // pred_check_branch
        %874 = sbr.rel (%p872) target = $region44
      $region43: #{tpu_custom_call.1} parent=39 // pred_region
        %s875 = smul.u32 4, %s21
      $region44: #{tpu_custom_call.1} parent=39 // pred_fallthru
        _
    $region40: #{tpu_custom_call.1} parent=5 // pred_fallthru
      _
    %p876 = scmp.le.s32.totalorder 2, %s11
    // Predicated region
    $region45: #{tpu_custom_call.1} parent=5 // pred_check
      %p877 = pneg %p876
    $region46: #{tpu_custom_call.1} parent=5 // pred_check_branch
      %879 = sbr.rel (%p877) target = $region48
    $region47: #{tpu_custom_call.1} parent=5 // pred_region
      %s880 = ssub.s32 %s11, 2
      // Predicated region
      $region49: #{tpu_custom_call.1} parent=47 // pred_check
        %p881 = pneg %p188
      $region50: #{tpu_custom_call.1} parent=47 // pred_check_branch
        %883 = sbr.rel (%p881) target = $region52
      $region51: #{tpu_custom_call.1} parent=47 // pred_region
        %s884 = smul.u32 4, %s23
        %p885 = scmp.lt.s32.totalorder %s22, 1
        %s886 = scalar_select %p885, %s22, 1
        %p887 = scmp.lt.s32.totalorder %s884, 3
        %s888 = scalar_select %p887, %s884, 3
        %s889 = smul.addr %s886, 4
        %s890 = sadd.s32 %s888, %s889
        %s891 = smul.addr %s890, 8
        %s892 = scalar_lea.vmem %s5, %s891
      $region52: #{tpu_custom_call.1} parent=47 // pred_fallthru
        _
    $region48: #{tpu_custom_call.1} parent=5 // pred_fallthru
      _
  $region6: #{tpu_custom_call.1} parent=0 // loop_footer
    %s15 = sadd.s32 1, %s11
  $region7: #{tpu_custom_call.1} parent=0 // loop_footer_branch
    %10 = sbr.rel target = $region3
  $region8: #{tpu_custom_call.1} parent=0 // loop_exit
    _

</llo_original>
